<compile_context>
chip_gen: v5e
topology: v5e:2x2
jax: 0.10.0
libtpu: 0.0.40
codegen_flags: <defaults>
</compile_context>

<pallas_src>
import jax
import jax.numpy as jnp
from jax import lax
from jax.experimental import pallas as pl
from jax.experimental.pallas import tpu as pltpu


def _cdiv(a, b):
    return -(-a // b)


def _vmem_capacity_bytes():
    try:
        return int(pltpu.get_tpu_info().vmem_capacity_bytes)
    except Exception:
        return 64 * 1024 * 1024      # conservative fallback (v7x per-core VMEM)


# --------------------------------------------------------------------------
# Resident fast path: whole (C, N) slab per batch element in VMEM.
# --------------------------------------------------------------------------
def _resident_kernel(gamma_ref, x_ref, o_ref):
    x = x_ref[...]                                           # (C, N) native dtype
    x32 = x.astype(jnp.float32)
    # affinity1 == affinity2 == x @ x^T (contract over flattened spatial axis)
    g = lax.dot_general(x, x, (((1,), (1,)), ((), ())),
                        preferred_element_type=jnp.float32)  # (C, C)
    aff = jnp.dot(g, g, preferred_element_type=jnp.float32)  # (C, C)
    aff_new = jnp.max(aff, axis=-1, keepdims=True) - aff
    m = jnp.max(aff_new, axis=-1, keepdims=True)
    e = jnp.exp(aff_new - m)
    p = e * pl.reciprocal(jnp.sum(e, axis=-1, keepdims=True), approx=False)
    w = jnp.dot(p, x32, preferred_element_type=jnp.float32)  # (C, N)
    o_ref[...] = (gamma_ref[0] * w + x32).astype(o_ref.dtype)


# --------------------------------------------------------------------------
# Streaming pass 1: accumulate the (Bf*C, Bf*C) Gram of x over N tiles.
# --------------------------------------------------------------------------
def _make_gram_kernel(TN, tiles_per_split, n_valid, needs_mask):
    def kernel(x_ref, g_ref):
        n = pl.program_id(2)

        @pl.when(n == 0)
        def _():
            g_ref[...] = jnp.zeros_like(g_ref)

        xt = x_ref[...]                                      # (BCf, TN)
        if needs_mask:
            # Zero columns past the true N (ragged tail and/or over-covered
            # tiles from the reduction split) before they reach the MXU.
            s = pl.program_id(1)
            t = s * tiles_per_split + n
            col = t * TN + lax.broadcasted_iota(jnp.int32, (1, TN), 1)
            xt = jnp.where(col < n_valid, xt, 0)
        g_ref[...] += lax.dot_general(
            xt, xt, (((1,), (1,)), ((), ())),
            preferred_element_type=jnp.float32)              # (BCf, BCf)
    return kernel


# --------------------------------------------------------------------------
# Streaming finalize: aff = g @ g, p = softmax(rowmax(aff) - aff), per batch.
# --------------------------------------------------------------------------
def _finalize_kernel(g_ref, p_ref):
    g = g_ref[...]                                           # (Bf, C, C) f32
    aff = jnp.einsum('bij,bjk->bik', g, g,
                     preferred_element_type=jnp.float32)
    aff_new = jnp.max(aff, axis=-1, keepdims=True) - aff
    m = jnp.max(aff_new, axis=-1, keepdims=True)
    e = jnp.exp(aff_new - m)
    p_ref[...] = e * pl.reciprocal(jnp.sum(e, axis=-1, keepdims=True),
                                   approx=False)


# --------------------------------------------------------------------------
# Streaming pass 2: out = gamma * (P_blockdiag @ x) + x, one lane-dense tile.
# --------------------------------------------------------------------------
def _apply_kernel(gamma_ref, p_ref, x_ref, o_ref):
    xt = x_ref[...]                                          # (BCf, TN) native
    x32 = xt.astype(jnp.float32)
    # p is kept in f32 so low-precision inputs don't quantize the softmax.
    w = jnp.dot(p_ref[...], x32, preferred_element_type=jnp.float32)
    o_ref[...] = (gamma_ref[0] * w + x32).astype(o_ref.dtype)


# --------------------------------------------------------------------------
# Wrapper
# --------------------------------------------------------------------------
def channel_attention_block_3d(x, gamma, *, force_stream=False,
                               max_tile_lanes=None):
    """Forward of ChannelAttentionBlock3d. x: (B, C, H, W, D); gamma: scalar/(1,)."""
    B, C, H, W, D = x.shape
    N = H * W * D
    itemsize = jnp.dtype(x.dtype).itemsize
    gamma = jnp.asarray(gamma, jnp.float32).reshape((1,))

    cap = _vmem_capacity_bytes()
    vmem_limit = min(int(cap * 0.7), 100 * 1024 * 1024)

    x_flat = x.reshape(B, C, N)

    # ---------------- resident fast path ----------------
    # live ~= 2x in + 2x out (double buffered) + f32 weights temp (+ f32 cast)
    resident_bytes = (4 * itemsize + 4 + (4 if itemsize < 4 else 0)) * C * N
    if (not force_stream and resident_bytes <= int(0.4 * cap)) or N < 128:
        out = pl.pallas_call(
            _resident_kernel,
            out_shape=jax.ShapeDtypeStruct((B, C, N), x.dtype),
            grid=(B,),
            in_specs=[
                pl.BlockSpec(memory_space=pltpu.MemorySpace.SMEM),      # gamma
                pl.BlockSpec((None, C, N), lambda b: (b, 0, 0)),        # x
            ],
            out_specs=pl.BlockSpec((None, C, N), lambda b: (b, 0, 0)),
            compiler_params=pltpu.CompilerParams(
                dimension_semantics=("parallel",),
                vmem_limit_bytes=vmem_limit),
            cost_estimate=pl.CostEstimate(
                flops=B * (4 * C * C * N + 2 * C * C * C),
                transcendentals=B * C * C,
                bytes_accessed=2 * B * C * N * itemsize),
        )(gamma, x_flat)
        return out.reshape(B, C, H, W, D)

    # ---------------- streaming path ----------------
    # Fold the batch into the matmul rows when it raises MXU utilization
    # (conservative 128-wide metric so it never hurts on v5e either).
    fold = (B == 1) or (_cdiv(B * C, 128) ** 2 <= B * _cdiv(C, 128) ** 2)
    G, Bf = (1, B) if fold else (B, 1)
    BCf = Bf * C
    x_g = x_flat.reshape(G, BCf, N)          # free reshape, no copy

    # Lane tile: largest multiple of 128 fitting the per-tile byte budget
    # (~cap/16: 4 MiB on v7x, 8 MiB on v5e/v6e) and not exceeding N.
    tile_budget = cap // 16
    TN = max(128, (tile_budget // max(1, BCf * itemsize)) // 128 * 128)
    TN = min(TN, max(128, (N // 128) * 128))
    if max_tile_lanes is not None:
        TN = max(128, min(TN, (max_tile_lanes // 128) * 128))
    n_tiles = _cdiv(N, TN)

    # Split the N reduction in two so pass 1 has a non-trivial parallel axis
    # (keeps both v7x TensorCores busy even when G == 1).
    n_splits = 2 if n_tiles >= 8 else 1
    tps = _cdiv(n_tiles, n_splits)
    over_cover = (n_splits * tps != n_tiles)
    needs_mask = (N % TN != 0) or over_cover

    def x_map1(g, s, n):
        t = s * tps + n
        if over_cover:
            t = jnp.minimum(t, n_tiles - 1)   # clamped; kernel masks it to zero
        return (g, 0, t)

    # -- pass 1: per-split partial Grams --
    gram = pl.pallas_call(
        _make_gram_kernel(TN, tps, N, needs_mask),
        out_shape=jax.ShapeDtypeStruct((G, n_splits, BCf, BCf), jnp.float32),
        grid=(G, n_splits, tps),
        in_specs=[pl.BlockSpec((None, BCf, TN), x_map1)],
        out_specs=pl.BlockSpec((None, None, BCf, BCf),
                               lambda g, s, n: (g, s, 0, 0)),
        compiler_params=pltpu.CompilerParams(
            dimension_semantics=("parallel", "parallel", "arbitrary"),
            vmem_limit_bytes=vmem_limit),
        cost_estimate=pl.CostEstimate(
            flops=2 * G * BCf * BCf * N,
            transcendentals=0,
            bytes_accessed=G * BCf * N * itemsize
                           + G * n_splits * BCf * BCf * 4),
    )(x_g)

    # -- reduce splits & take the per-batch diagonal CxC blocks (tiny, XLA) --
    gsum = jnp.sum(gram, axis=1)                                  # (G, BCf, BCf)
    gdiag = jnp.stack(
        [gsum[:, b * C:(b + 1) * C, b * C:(b + 1) * C] for b in range(Bf)],
        axis=1)                                                   # (G, Bf, C, C)

    # -- finalize: aff = g @ g, p = softmax(rowmax(aff) - aff) --
    p = pl.pallas_call(
        _finalize_kernel,
        out_shape=jax.ShapeDtypeStruct((G, Bf, C, C), jnp.float32),
        grid=(G,),
        in_specs=[pl.BlockSpec((None, Bf, C, C), lambda g: (g, 0, 0, 0))],
        out_specs=pl.BlockSpec((None, Bf, C, C), lambda g: (g, 0, 0, 0)),
        compiler_params=pltpu.CompilerParams(
            dimension_semantics=("parallel",),
            vmem_limit_bytes=vmem_limit),
    )(gdiag)

    # -- block-diagonal p so pass 2 applies all folded batches in one matmul --
    if Bf == 1:
        pbd = p[:, 0]                                             # (G, C, C)
    else:
        pbd = jnp.zeros((G, BCf, BCf), jnp.float32)
        for b in range(Bf):
            pbd = pbd.at[:, b * C:(b + 1) * C, b * C:(b + 1) * C].set(p[:, b])

    # -- pass 2: out = gamma * (p @ x) + x, streamed over lane-dense tiles --
    out_g = pl.pallas_call(
        _apply_kernel,
        out_shape=jax.ShapeDtypeStruct((G, BCf, N), x.dtype),
        grid=(G, n_tiles),
        in_specs=[
            pl.BlockSpec(memory_space=pltpu.MemorySpace.SMEM),            # gamma
            pl.BlockSpec((None, BCf, BCf), lambda g, n: (g, 0, 0)),       # p_bd
            pl.BlockSpec((None, BCf, TN), lambda g, n: (g, 0, n)),        # x tile
        ],
        out_specs=pl.BlockSpec((None, BCf, TN), lambda g, n: (g, 0, n)),
        compiler_params=pltpu.CompilerParams(
            dimension_semantics=("parallel", "parallel"),
            vmem_limit_bytes=vmem_limit),
        cost_estimate=pl.CostEstimate(
            flops=2 * G * BCf * BCf * N + 3 * G * BCf * N,
            transcendentals=0,
            bytes_accessed=2 * G * BCf * N * itemsize + G * BCf * BCf * 4),
    )(gamma, pbd, x_g)

    return out_g.reshape(B, C, H, W, D)


# --------------------------------------------------------------------------
# Pure-JAX reference mirroring the PyTorch forward.
# --------------------------------------------------------------------------
def _reference(x, gamma):
    B, C, H, W, D = x.shape
    xf = x.reshape(B, C, -1).astype(jnp.float32)
    aff1 = jnp.einsum('bcn,bdn->bcd', xf, xf)        # key @ query
    aff = jnp.einsum('bcd,bde->bce', aff1, aff1)     # (key@query) @ (key@judge)
    aff_new = jnp.max(aff, axis=-1, keepdims=True) - aff
    p = jax.nn.softmax(aff_new, axis=-1)
    w = jnp.einsum('bcd,bdn->bcn', p, xf).reshape(x.shape)
    g = jnp.asarray(gamma, jnp.float32).reshape(())
    return (g * w + x.astype(jnp.float32)).astype(x.dtype)


if __name__ == "__main__":
    key = jax.random.PRNGKey(0)
    k1, k2, k3, k4 = jax.random.split(key, 4)

    gamma0 = jnp.zeros((1,), jnp.float32)     # module init: gamma = zeros(1)
    gamma = jnp.full((1,), 0.5, jnp.float32)

    # 1) resident path, N a multiple of 128  (B=2, C=4, 8x8x8 -> N=512)
    x1 = jax.random.normal(k1, (2, 4, 8, 8, 8), jnp.float32)
    o = channel_attention_block_3d(x1, gamma0)
    jax.block_until_ready(o)
    assert jnp.allclose(o, _reference(x1, gamma0), rtol=1e-5, atol=1e-4), \
        "mismatch (resident, gamma=0)"
    o = channel_attention_block_3d(x1, gamma)
    jax.block_until_ready(o)
    assert jnp.allclose(o, _reference(x1, gamma), rtol=1e-5, atol=1e-4), \
        "mismatch (resident, gamma=0.5)"

    # 2) resident path, ragged N  (5*6*7 = 210, not a multiple of 128)
    x2 = 0.1 * jax.random.normal(k2, (2, 8, 5, 6, 7), jnp.float32)
    o = channel_attention_block_3d(x2, gamma)
    jax.block_until_ready(o)
    assert jnp.allclose(o, _reference(x2, gamma), rtol=1e-4, atol=5e-4), \
        "mismatch (resident, ragged N)"

    # 3) streaming path, batch-folded, ragged N with reduction split + masking
    #    (N = 11^3 = 1331 -> 11 tiles of 128, 2 splits, over-covered last tile)
    x3 = 0.1 * jax.random.normal(k3, (2, 8, 11, 11, 11), jnp.float32)
    o = channel_attention_block_3d(x3, gamma, force_stream=True,
                                   max_tile_lanes=128)
    jax.block_until_ready(o)
    assert jnp.allclose(o, _reference(x3, gamma), rtol=1e-4, atol=5e-4), \
        "mismatch (streaming, folded)"

    # 4) streaming path, non-folded (C = 128 already fills the MXU)
    x4 = 0.1 * jax.random.normal(k4, (2, 128, 4, 8, 8), jnp.float32)
    o = channel_attention_block_3d(x4, gamma, force_stream=True,
                                   max_tile_lanes=128)
    jax.block_until_ready(o)
    assert jnp.allclose(o, _reference(x4, gamma), rtol=1e-4, atol=5e-4), \
        "mismatch (streaming, non-folded)"

    print("KERNEL_OK")
</pallas_src>

<mosaic_0001>
module attributes {stable_mosaic.version = 11 : i64} {
  func.func @_resident_kernel(%arg0: i32, %arg1: memref<1xf32, #tpu.memory_space<smem>>, %arg2: memref<1x4x512xf32, #tpu.memory_space<vmem>>, %arg3: memref<1x4x512xf32, #tpu.memory_space<vmem>>) attributes {dimension_semantics = [#tpu.dimension_semantics<parallel>], iteration_bounds = array<i64: 2>, scalar_prefetch = 0 : i64, scratch_operands = 0 : i64, tpu.core_type = #tpu.core_type<tc>, window_params = [{transform_indices = @transform_0, window_bounds = array<i64: 1>}, {transform_indices = @transform_1, window_bounds = array<i64: 1, 4, 512>}, {transform_indices = @transform_2, window_bounds = array<i64: 1, 4, 512>}]} {
    %c0 = arith.constant 0 : index
    %c0_0 = arith.constant 0 : index
    %c0_1 = arith.constant 0 : index
    %0 = vector.load %arg2[%c0, %c0_0, %c0_1] : memref<1x4x512xf32, #tpu.memory_space<vmem>>, vector<1x4x512xf32>
    %1 = vector.shape_cast %0 : vector<1x4x512xf32> to vector<4x512xf32>
    %cst = arith.constant dense<0.000000e+00> : vector<4x4xf32>
    %2 = tpu.matmul %1, %1, %cst {dimension_numbers = #tpu.dot_dimension_numbers<[1], [1], [0], [0], [0, 0, 1, 0], [], []>} : vector<4x512xf32>, vector<4x512xf32>, vector<4x4xf32> -> vector<4x4xf32>
    %cst_2 = arith.constant dense<0.000000e+00> : vector<4x4xf32>
    %3 = tpu.matmul %2, %2, %cst_2 {dimension_numbers = #tpu.dot_dimension_numbers<[1], [0], [0], [1], [0, 0, 1, 1], [], []>} : vector<4x4xf32>, vector<4x4xf32>, vector<4x4xf32> -> vector<4x4xf32>
    %cst_3 = arith.constant dense<0xFF800000> : vector<4xf32>
    %4 = vector.multi_reduction <maximumf>, %3, %cst_3 [1] : vector<4x4xf32> to vector<4xf32>
    %5 = vector.shape_cast %4 : vector<4xf32> to vector<4x1xf32>
    %6 = vector.broadcast %5 : vector<4x1xf32> to vector<4x4xf32>
    %7 = arith.subf %6, %3 : vector<4x4xf32>
    %cst_4 = arith.constant dense<0xFF800000> : vector<4xf32>
    %8 = vector.multi_reduction <maximumf>, %7, %cst_4 [1] : vector<4x4xf32> to vector<4xf32>
    %9 = vector.shape_cast %8 : vector<4xf32> to vector<4x1xf32>
    %10 = vector.broadcast %9 : vector<4x1xf32> to vector<4x4xf32>
    %11 = arith.subf %7, %10 : vector<4x4xf32>
    %12 = math.exp %11 : vector<4x4xf32>
    %cst_5 = arith.constant dense<0.000000e+00> : vector<4xf32>
    %13 = vector.multi_reduction <add>, %12, %cst_5 [1] : vector<4x4xf32> to vector<4xf32>
    %14 = vector.shape_cast %13 : vector<4xf32> to vector<4x1xf32>
    %15 = tpu.reciprocal %14 : vector<4x1xf32> -> vector<4x1xf32>
    %16 = vector.broadcast %15 : vector<4x1xf32> to vector<4x4xf32>
    %17 = arith.mulf %12, %16 : vector<4x4xf32>
    %cst_6 = arith.constant dense<0.000000e+00> : vector<4x512xf32>
    %18 = tpu.matmul %17, %1, %cst_6 {dimension_numbers = #tpu.dot_dimension_numbers<[1], [0], [0], [1], [0, 0, 1, 1], [], []>} : vector<4x4xf32>, vector<4x512xf32>, vector<4x512xf32> -> vector<4x512xf32>
    %c0_7 = arith.constant 0 : index
    %19 = memref.load %arg1[%c0_7] : memref<1xf32, #tpu.memory_space<smem>>
    %20 = vector.broadcast %19 : f32 to vector<4x512xf32>
    %21 = arith.mulf %20, %18 : vector<4x512xf32>
    %22 = arith.addf %21, %1 : vector<4x512xf32>
    %c0_8 = arith.constant 0 : index
    %c0_9 = arith.constant 0 : index
    %c0_10 = arith.constant 0 : index
    %23 = vector.load %arg3[%c0_8, %c0_9, %c0_10] : memref<1x4x512xf32, #tpu.memory_space<vmem>>, vector<1x4x512xf32>
    %24 = vector.shape_cast %23 : vector<1x4x512xf32> to vector<4x512xf32>
    %25 = vector.shape_cast %22 : vector<4x512xf32> to vector<1x4x512xf32>
    tpu.vector_store %arg3[%c0_8, %c0_9, %c0_10], %25 {strides = array<i32>} : memref<1x4x512xf32, #tpu.memory_space<vmem>>, vector<1x4x512xf32>,
    return
  }
  func.func @transform_0(%arg0: i32) -> i32 {
    %c0_i32 = arith.constant 0 : i32
    %c0_i32_0 = arith.constant 0 : i32
    return %c0_i32 : i32
  }
  func.func @transform_1(%arg0: i32) -> (i32, i32, i32) {
    %c0_i32 = arith.constant 0 : i32
    %c0_i32_0 = arith.constant 0 : i32
    %c0_i32_1 = arith.constant 0 : i32
    return %arg0, %c0_i32, %c0_i32_0 : i32, i32, i32
  }
  func.func @transform_2(%arg0: i32) -> (i32, i32, i32) {
    %c0_i32 = arith.constant 0 : i32
    %c0_i32_0 = arith.constant 0 : i32
    %c0_i32_1 = arith.constant 0 : i32
    return %arg0, %c0_i32, %c0_i32_0 : i32, i32, i32
  }
}

</mosaic_0001>

<llo_original>
// kernel: tpu_custom_call.1
$region0: #{tpu_custom_call.1}
  #allocation0 [shape = 'u32[]', space=smem, size = 0x4, offset = 0x4, fixed_abs, tag = 'smem constant byte address 0x4 - core index']
  #allocation1 [shape = 'u32[72,128]{1,0:T(1,128)}', space=vmem, size = 0x9000, scoped, tag = 'internal scratch']
  #allocation2 [shape = 'f32[1]{0:T(128)S(6)}', space=smem, size = 0x200, scoped, tag = 'scoped memory for tpu_custom_call.1']
  %s0 = inlined_call_operand.<no memory space> [shape: f32[1], index: 0, kind: input, shape index: {}]
  %s1 = inlined_call_operand.hbm [shape: f32[2,4,512], index: 1, kind: input, shape index: {}]
  %s2 = inlined_call_operand.hbm [shape: f32[2,4,512], index: 2, kind: output, shape index: {}]
  %s3 = sld [smem:[#allocation0]]
  $region45: #{tpu_custom_call.1} parent=0
    _
  %s5 = ssub.s32 1, %s3
  %s6 = scalar_select 0, %s5, %s3
  %7 = sst [smem:[#allocation2]] %s0
  $region1: #{tpu_custom_call.1} parent=0
    #allocation3 [shape = 'u8[16384]{0}', space=vmem, size = 0x4000, scoped, tag = 'input window, operand 1']
    #allocation4 [shape = 's32[2]{0}', space=sflag, size = 0x8, scoped, tag = 'scoped memory for tpu_custom_call.1']
    #allocation5 [shape = 's32[2]{0}', space=sflag, size = 0x8, scoped, tag = 'scoped memory for tpu_custom_call.1']
    #allocation6 [shape = 'u8[16384]{0}', space=vmem, size = 0x4000, scoped, tag = 'output window, operand 0']
    %8 = vsyncpa [#allocation4], 0
    %s9 = scalar_lea.sflag [#allocation4], 1
    %10 = vsyncpa %s9, 0
    %11 = vsyncpa [#allocation5], 0
    %s12 = scalar_lea.sflag [#allocation5], 1
    %13 = vsyncpa %s12, 0
    loop: start=0, step=1, limit=4
    $region2: #{tpu_custom_call.1} parent=1 // loop_pre_header
      _
    $region3: #{tpu_custom_call.1} parent=1 // loop_header
      %s15 = sphi 0, %s19
      %p16 = scmp.ge.s32.totalorder %s15, 4
      %s23 = sphi 0, %s23
      %s25 = sphi 0, %s23
      %s26 = sphi 0, %s25
      %s40 = sphi 0, %s26
      %s46 = sphi 0, %s48
      %s49 = sphi 0, %s46
      %s50 = sphi 0, %s49
      %s66 = sphi 0, %s50
      %s72 = sphi 0, %s74
      %s75 = sphi 0, %s72
      %s76 = sphi 0, %s75
      %s92 = sphi 0, %s76
    $region4: #{tpu_custom_call.1} parent=1 // loop_header_branch
      %18 = sbr.rel (%p16) target = $region8
    $region5: #{tpu_custom_call.1} parent=1 // loop_body
      %s20 = ssub.s32 %s15, 1
      %s21 = ssub.s32 %s15, 2
      %s22 = sadd.s32 %s15, 1
      %s24 = sadd.s32 %s23, 1
      %p27 = scmp.eq.s32.totalorder %s15, 1
      %p28 = scmp.ne.s32.totalorder %s23, %s25
      %p29 = scmp.eq.s32.totalorder %s15, 0
      %p30 = por %p28, %p29
      %p31 = scmp.ne.s32.totalorder %s23, %s25
      %p32 = scmp.eq.s32.totalorder %s20, 1
      %p33 = por %p31, %p32
      %p34 = scmp.ne.s32.totalorder %s25, %s26
      %p35 = scmp.eq.s32.totalorder %s20, 0
      %p36 = por %p34, %p35
      %p37 = scmp.ne.s32.totalorder %s25, %s26
      %p38 = scmp.eq.s32.totalorder %s21, 1
      %p39 = por %p37, %p38
      %p41 = scmp.ne.s32.totalorder %s26, %s40
      %p42 = scmp.eq.s32.totalorder %s21, 0
      %p43 = por %p41, %p42
      %s44 = ssub.s32 %s15, %s22
      %p45 = scmp.eq.s32.totalorder %s44, 0
      %s47 = sadd.s32 %s46, 1
      %s48 = scalar_select %p45, %s46, %s47
      %p51 = pneg %p45
      %p52 = scmp.eq.s32.totalorder %s15, 1
      %p53 = por %p51, %p52
      %p54 = scmp.ne.s32.totalorder %s46, %s49
      %p55 = scmp.eq.s32.totalorder %s15, 0
      %p56 = por %p54, %p55
      %p57 = scmp.ne.s32.totalorder %s46, %s49
      %p58 = scmp.eq.s32.totalorder %s20, 1
      %p59 = por %p57, %p58
      %p60 = scmp.ne.s32.totalorder %s49, %s50
      %p61 = scmp.eq.s32.totalorder %s20, 0
      %p62 = por %p60, %p61
      %p63 = scmp.ne.s32.totalorder %s49, %s50
      %p64 = scmp.eq.s32.totalorder %s21, 1
      %p65 = por %p63, %p64
      %p67 = scmp.ne.s32.totalorder %s50, %s66
      %p68 = scmp.eq.s32.totalorder %s21, 0
      %p69 = por %p67, %p68
      %s70 = ssub.s32 %s15, %s22
      %p71 = scmp.eq.s32.totalorder %s70, 0
      %s73 = sadd.s32 %s72, 1
      %s74 = scalar_select %p71, %s72, %s73
      %p77 = pneg %p71
      %p78 = scmp.eq.s32.totalorder %s15, 1
      %p79 = por %p77, %p78
      %p80 = scmp.ne.s32.totalorder %s72, %s75
      %p81 = scmp.eq.s32.totalorder %s15, 0
      %p82 = por %p80, %p81
      %p83 = scmp.ne.s32.totalorder %s72, %s75
      %p84 = scmp.eq.s32.totalorder %s20, 1
      %p85 = por %p83, %p84
      %p86 = scmp.ne.s32.totalorder %s75, %s76
      %p87 = scmp.eq.s32.totalorder %s20, 0
      %p88 = por %p86, %p87
      %p89 = scmp.ne.s32.totalorder %s75, %s76
      %p90 = scmp.eq.s32.totalorder %s21, 1
      %p91 = por %p89, %p90
      %p93 = scmp.ne.s32.totalorder %s76, %s92
      %p94 = scmp.eq.s32.totalorder %s21, 0
      %p95 = por %p93, %p94
      %p96 = scmp.le.s32.totalorder 1, %s15
      %p97 = scmp.lt.s32.totalorder %s15, 3
      %p98 = pnand %p96, %p97
      %p99 = pneg %p98
      // Predicated region
      $region9: #{tpu_custom_call.1} parent=5 // pred_check
        _
      $region10: #{tpu_custom_call.1} parent=5 // pred_check_branch
        %101 = sbr.rel (%p98) target = $region12
      $region11: #{tpu_custom_call.1} parent=5 // pred_region
        %s102 = ssub.s32 %s15, 1
        // Predicated region
        $region13: #{tpu_custom_call.1} parent=11 // pred_check
          %p103 = pneg %p36
        $region14: #{tpu_custom_call.1} parent=11 // pred_check_branch
          %105 = sbr.rel (%p103) target = $region16
        $region15: #{tpu_custom_call.1} parent=11 // pred_region
          _
        $region16: #{tpu_custom_call.1} parent=11 // pred_fallthru
          _
      $region12: #{tpu_custom_call.1} parent=5 // pred_fallthru
        _
      %p106 = scmp.lt.s32.totalorder %s15, 2
      // Predicated region
      $region17: #{tpu_custom_call.1} parent=5 // pred_check
        %p107 = pneg %p106
      $region18: #{tpu_custom_call.1} parent=5 // pred_check_branch
        %109 = sbr.rel (%p107) target = $region20
      $region19: #{tpu_custom_call.1} parent=5 // pred_region
        // Predicated region
        $region21: #{tpu_custom_call.1} parent=19 // pred_check
          %p110 = pneg %p56
        $region22: #{tpu_custom_call.1} parent=19 // pred_check_branch
          %112 = sbr.rel (%p110) target = $region24
        $region23: #{tpu_custom_call.1} parent=19 // pred_region
          %s113 = sand.u32 %s46, 1
          %s114 = scalar_lea.sflag [#allocation4], %s113
          %s115 = sand.u32 %s46, 1
          %s116 = smul.addr %s115, 16
          %s117 = scalar_lea.vmem [#allocation3], %s116
          %119 = vsyncadd %s114, 0
          %s120 = smul.addr %s15, 4
          %s121 = smul.addr %s120, 4
          %s122 = scalar_lea.hbm %s1, %s121
          %s124 = sshll.u32 %s122, 4
          %s125 = int_to_ptr.hbm [resolvable:$true] %s124
          %s126 = sshll.u32 %s117, 4
          %s127 = int_to_ptr.vmem [resolvable:$true] %s126
          %129 = dma.hbm_to_vmem [thread:$0]  %s125, 256, %s127, %s114
        $region24: #{tpu_custom_call.1} parent=19 // pred_fallthru
          _
      $region20: #{tpu_custom_call.1} parent=5 // pred_fallthru
        _
      %p130 = scmp.le.s32.totalorder 1, %s15
      %p131 = scmp.lt.s32.totalorder %s15, 3
      %p132 = pnand %p130, %p131
      %p133 = pneg %p132
      // Predicated region
      $region25: #{tpu_custom_call.1} parent=5 // pred_check
        _
      $region26: #{tpu_custom_call.1} parent=5 // pred_check_branch
        %135 = sbr.rel (%p132) target = $region28
      $region27: #{tpu_custom_call.1} parent=5 // pred_region
        %s136 = ssub.s32 %s15, 1
        %s137 = sand.u32 %s49, 1
        %s138 = scalar_lea.sflag [#allocation4], %s137
        %s139 = sand.u32 %s49, 1
        %s140 = smul.addr %s139, 16
        %s141 = scalar_lea.vmem [#allocation3], %s140
        // Predicated region
        $region29: #{tpu_custom_call.1} parent=27 // pred_check
          %p142 = pneg %p62
        $region30: #{tpu_custom_call.1} parent=27 // pred_check_branch
          %144 = sbr.rel (%p142) target = $region32
        $region31: #{tpu_custom_call.1} parent=27 // pred_region
          %146 = dma.done %s138, 256
        $region32: #{tpu_custom_call.1} parent=27 // pred_fallthru
          _
        %p147 = pneg %p36
        %p148 = pneg %p33
        %s149 = sand.u32 %s49, 1
        %s150 = scalar_lea.sflag [#allocation4], %s149
        %s151 = sand.u32 %s49, 1
        %s152 = smul.addr %s151, 16
        %s153 = scalar_lea.vmem [#allocation3], %s152
        %p154 = pneg %p62
        %p155 = pneg %p59
        %p156 = pneg %p88
        %p157 = pneg %p85
        %s158 = sand.u32 %s75, 1
        %s159 = scalar_lea.sflag [#allocation5], %s158
        %s160 = sand.u32 %s75, 1
        %s161 = smul.addr %s160, 16
        %s162 = scalar_lea.vmem [#allocation6], %s161
        %v163 = vld [vmem:[%s141] sm:$0xff]
        %v164 = vld [vmem:[%s141 + $0x8] sm:$0xff]
        %167 = vst [vmem:[#allocation1] ss:$2 sm:$0xff] %v163
        %s168 = scalar_lea.vmem [#allocation1], 16
        %169 = vst [vmem:[%s168] ss:$2 sm:$0xff] %v164
        %v170 = vld.sshfl [vmem:[#allocation1] sm:$0xff pattern:$0x75316420]
        %v171 = vld.sshfl [vmem:[#allocation1 + $0x8] sm:$0xff pattern:$0x75316420]
        %v172 = vld.sshfl [vmem:[#allocation1 + $0x10] sm:$0xff pattern:$0x75316420]
        %v173 = vld.sshfl [vmem:[#allocation1 + $0x18] sm:$0xff pattern:$0x75316420]
        %178 = vst [vmem:[#allocation1] ss:$2 sm:$0xff] %v163
        %s179 = scalar_lea.vmem [#allocation1], 16
        %180 = vst [vmem:[%s179] ss:$2 sm:$0xff] %v164
        %v181 = vld.sshfl [vmem:[#allocation1] sm:$0xff pattern:$0x75316420]
        %v182 = vld.sshfl [vmem:[#allocation1 + $0x8] sm:$0xff pattern:$0x75316420]
        %v183 = vld.sshfl [vmem:[#allocation1 + $0x10] sm:$0xff pattern:$0x75316420]
        %v184 = vld.sshfl [vmem:[#allocation1 + $0x18] sm:$0xff pattern:$0x75316420]
        %189 = vmatpush.xpose.msra.mxu0 0.0
        %190 = vmatpush.xpose.msra.mxu0 0.0
        %191 = vmatpush.xpose.msra.mxu0 0.0
        %192 = vmatpush.xpose.msra.mxu0 0.0
        %193 = vmatpush.xpose.msra.mxu0 0.0
        %194 = vmatpush.xpose.msra.mxu0 0.0
        %195 = vmatpush.xpose.msra.mxu0 0.0
        %196 = vmatpush.xpose.msra.mxu0 0.0
        %197 = vmatpush.xpose.msra.mxu0 0.0
        %198 = vmatpush.xpose.msra.mxu0 0.0
        %199 = vmatpush.xpose.msra.mxu0 0.0
        %200 = vmatpush.xpose.msra.mxu0 0.0
        %201 = vmatpush.xpose.msra.mxu0 0.0
        %202 = vmatpush.xpose.msra.mxu0 0.0
        %203 = vmatpush.xpose.msra.mxu0 0.0
        %204 = vmatpush.xpose.msra.mxu0 %v181
        %205 = vmatmul.f32.gmra.mxu0 %v170
        %v206 = vpop.f32.mrf.mxu0
        %v207 = vadd.f32 0.0, %v206
        %208 = vdwg.mxu0
        %209 = vmatpush.xpose.msra.mxu0 0.0
        %210 = vmatpush.xpose.msra.mxu0 0.0
        %211 = vmatpush.xpose.msra.mxu0 0.0
        %212 = vmatpush.xpose.msra.mxu0 0.0
        %213 = vmatpush.xpose.msra.mxu0 0.0
        %214 = vmatpush.xpose.msra.mxu0 0.0
        %215 = vmatpush.xpose.msra.mxu0 0.0
        %216 = vmatpush.xpose.msra.mxu0 0.0
        %217 = vmatpush.xpose.msra.mxu0 0.0
        %218 = vmatpush.xpose.msra.mxu0 0.0
        %219 = vmatpush.xpose.msra.mxu0 0.0
        %220 = vmatpush.xpose.msra.mxu0 0.0
        %221 = vmatpush.xpose.msra.mxu0 0.0
        %222 = vmatpush.xpose.msra.mxu0 0.0
        %223 = vmatpush.xpose.msra.mxu0 0.0
        %224 = vmatpush.xpose.msra.mxu0 %v182
        %225 = vmatmul.f32.gmra.mxu0 %v171
        %v226 = vpop.f32.mrf.mxu0
        %v227 = vadd.f32 %v207, %v226
        %228 = vdwg.mxu0
        %229 = vmatpush.xpose.msra.mxu0 0.0
        %230 = vmatpush.xpose.msra.mxu0 0.0
        %231 = vmatpush.xpose.msra.mxu0 0.0
        %232 = vmatpush.xpose.msra.mxu0 0.0
        %233 = vmatpush.xpose.msra.mxu0 0.0
        %234 = vmatpush.xpose.msra.mxu0 0.0
        %235 = vmatpush.xpose.msra.mxu0 0.0
        %236 = vmatpush.xpose.msra.mxu0 0.0
        %237 = vmatpush.xpose.msra.mxu0 0.0
        %238 = vmatpush.xpose.msra.mxu0 0.0
        %239 = vmatpush.xpose.msra.mxu0 0.0
        %240 = vmatpush.xpose.msra.mxu0 0.0
        %241 = vmatpush.xpose.msra.mxu0 0.0
        %242 = vmatpush.xpose.msra.mxu0 0.0
        %243 = vmatpush.xpose.msra.mxu0 0.0
        %244 = vmatpush.xpose.msra.mxu0 %v183
        %245 = vmatmul.f32.gmra.mxu0 %v172
        %v246 = vpop.f32.mrf.mxu0
        %v247 = vadd.f32 %v227, %v246
        %248 = vdwg.mxu0
        %249 = vmatpush.xpose.msra.mxu0 0.0
        %250 = vmatpush.xpose.msra.mxu0 0.0
        %251 = vmatpush.xpose.msra.mxu0 0.0
        %252 = vmatpush.xpose.msra.mxu0 0.0
        %253 = vmatpush.xpose.msra.mxu0 0.0
        %254 = vmatpush.xpose.msra.mxu0 0.0
        %255 = vmatpush.xpose.msra.mxu0 0.0
        %256 = vmatpush.xpose.msra.mxu0 0.0
        %257 = vmatpush.xpose.msra.mxu0 0.0
        %258 = vmatpush.xpose.msra.mxu0 0.0
        %259 = vmatpush.xpose.msra.mxu0 0.0
        %260 = vmatpush.xpose.msra.mxu0 0.0
        %261 = vmatpush.xpose.msra.mxu0 0.0
        %262 = vmatpush.xpose.msra.mxu0 0.0
        %263 = vmatpush.xpose.msra.mxu0 0.0
        %264 = vmatpush.xpose.msra.mxu0 %v184
        %265 = vmatmul.f32.gmra.mxu0 %v173
        %v266 = vpop.f32.mrf.mxu0
        %v267 = vadd.f32 %v247, %v266
        %268 = vdwg.mxu0
        %vm269 = vcmask 31744
        %v271 = vsel %vm269, %v267, 0
        %vm273 = vcmask 1043456
        %v274 = vsel %vm273, %v267, 0
        %276 = vmatpush.msra.mxu0 0.0
        %277 = vmatpush.msra.mxu0 0.0
        %278 = vmatpush.msra.mxu0 0.0
        %279 = vmatpush.msra.mxu0 0.0
        %280 = vmatpush.msra.mxu0 0.0
        %281 = vmatpush.msra.mxu0 0.0
        %282 = vmatpush.msra.mxu0 0.0
        %283 = vmatpush.msra.mxu0 0.0
        %284 = vmatpush.msra.mxu0 0.0
        %285 = vmatpush.msra.mxu0 0.0
        %286 = vmatpush.msra.mxu0 0.0
        %287 = vmatpush.msra.mxu0 0.0
        %288 = vmatpush.msra.mxu0 0.0
        %289 = vmatpush.msra.mxu0 0.0
        %290 = vmatpush.msra.mxu0 0.0
        %291 = vmatpush.msra.mxu0 %v274
        %292 = vmatmul.f32.gmra.mxu0 %v271
        %v293 = vpop.f32.mrf.mxu0
        %v294 = vadd.f32 0.0, %v293
        %295 = vdwg.mxu0
        %vm296 = vcmask 27648
        %v297 = vsel %vm296, %v294, -inf
        %298 = vmax.xlane.f32.xlu0 %v297
        %v299 = vpop.xlane.xlu0 %298
        %v300 = vsub.f32 %v299, %v294
        %v301 = vsel %vm296, %v300, -inf
        %302 = vmax.xlane.f32.xlu0 %v301
        %v303 = vpop.xlane.xlu0 %302
        %v304 = vsub.f32 %v300, %v303
        %v305 = vmul.f32 %v304, 1.442695
        %v306 = vpow.pop %v305
        %v307 = vsel %vm296, %v306, 0.0
        %308 = vadd.xlane.f32.xlu0 %v307
        %v309 = vpop.xlane.xlu0 %308
        %v310 = vrcp.pop %v309
        %v311 = vmul.f32 %v309, %v310
        %v312 = vsub.f32 1.0, %v311
        %v313 = vmul.f32 %v310, %v312
        %v314 = vadd.f32 %v310, %v313
        %vm315 = vweird.f32 %v309
        %vm316 = vweird.f32 %v310
        %vm317 = vmor %vm315, %vm316
        %v318 = vsel %vm317, %v310, %v314
        %v319 = vand.u32 2147483647, %v309
        %vm320 = vcmp.eq.f32.partialorder %v319, 8.507059e+37
        %v321 = vand.u32 %v309, 2147483648
        %v322 = vor.u32 1.1754944e-38, %v321
        %v323 = vsel %vm320, %v322, %v318
        %v324 = vmul.f32 %v306, %v323
        %325 = vst [vmem:[#allocation1] ss:$2 sm:$0xff] %v163
        %s326 = scalar_lea.vmem [#allocation1], 16
        %327 = vst [vmem:[%s326] ss:$2 sm:$0xff] %v164
        %v328 = vld.sshfl [vmem:[#allocation1] sm:$0xff pattern:$0x75316420]
        %v329 = vld.sshfl [vmem:[#allocation1 + $0x8] sm:$0xff pattern:$0x75316420]
        %v330 = vld.sshfl [vmem:[#allocation1 + $0x10] sm:$0xff pattern:$0x75316420]
        %v331 = vld.sshfl [vmem:[#allocation1 + $0x18] sm:$0xff pattern:$0x75316420]
        %v333 = vsel %vm269, %v324, 0
        %v335 = vsel %vm273, %v328, 0
        %v337 = vsel %vm273, %v329, 0
        %v339 = vsel %vm273, %v330, 0
        %v341 = vsel %vm273, %v331, 0
        %343 = vmatpush.msra.mxu0 0.0
        %344 = vmatpush.msra.mxu0 0.0
        %345 = vmatpush.msra.mxu0 0.0
        %346 = vmatpush.msra.mxu0 0.0
        %347 = vmatpush.msra.mxu0 0.0
        %348 = vmatpush.msra.mxu0 0.0
        %349 = vmatpush.msra.mxu0 0.0
        %350 = vmatpush.msra.mxu0 0.0
        %351 = vmatpush.msra.mxu0 0.0
        %352 = vmatpush.msra.mxu0 0.0
        %353 = vmatpush.msra.mxu0 0.0
        %354 = vmatpush.msra.mxu0 0.0
        %355 = vmatpush.msra.mxu0 0.0
        %356 = vmatpush.msra.mxu0 0.0
        %357 = vmatpush.msra.mxu0 0.0
        %358 = vmatpush.msra.mxu0 %v335
        %359 = vmatmul.f32.gmra.mxu0 %v333
        %v360 = vpop.f32.mrf.mxu0
        %v361 = vadd.f32 0.0, %v360
        %362 = vdwg.mxu0
        %363 = vmatpush.msra.mxu0 0.0
        %364 = vmatpush.msra.mxu0 0.0
        %365 = vmatpush.msra.mxu0 0.0
        %366 = vmatpush.msra.mxu0 0.0
        %367 = vmatpush.msra.mxu0 0.0
        %368 = vmatpush.msra.mxu0 0.0
        %369 = vmatpush.msra.mxu0 0.0
        %370 = vmatpush.msra.mxu0 0.0
        %371 = vmatpush.msra.mxu0 0.0
        %372 = vmatpush.msra.mxu0 0.0
        %373 = vmatpush.msra.mxu0 0.0
        %374 = vmatpush.msra.mxu0 0.0
        %375 = vmatpush.msra.mxu0 0.0
        %376 = vmatpush.msra.mxu0 0.0
        %377 = vmatpush.msra.mxu0 0.0
        %378 = vmatpush.msra.mxu0 %v337
        %379 = vmatmul.f32.gmra.mxu0 %v333
        %v380 = vpop.f32.mrf.mxu0
        %v381 = vadd.f32 0.0, %v380
        %382 = vdwg.mxu0
        %383 = vmatpush.msra.mxu0 0.0
        %384 = vmatpush.msra.mxu0 0.0
        %385 = vmatpush.msra.mxu0 0.0
        %386 = vmatpush.msra.mxu0 0.0
        %387 = vmatpush.msra.mxu0 0.0
        %388 = vmatpush.msra.mxu0 0.0
        %389 = vmatpush.msra.mxu0 0.0
        %390 = vmatpush.msra.mxu0 0.0
        %391 = vmatpush.msra.mxu0 0.0
        %392 = vmatpush.msra.mxu0 0.0
        %393 = vmatpush.msra.mxu0 0.0
        %394 = vmatpush.msra.mxu0 0.0
        %395 = vmatpush.msra.mxu0 0.0
        %396 = vmatpush.msra.mxu0 0.0
        %397 = vmatpush.msra.mxu0 0.0
        %398 = vmatpush.msra.mxu0 %v339
        %399 = vmatmul.f32.gmra.mxu0 %v333
        %v400 = vpop.f32.mrf.mxu0
        %v401 = vadd.f32 0.0, %v400
        %402 = vdwg.mxu0
        %403 = vmatpush.msra.mxu0 0.0
        %404 = vmatpush.msra.mxu0 0.0
        %405 = vmatpush.msra.mxu0 0.0
        %406 = vmatpush.msra.mxu0 0.0
        %407 = vmatpush.msra.mxu0 0.0
        %408 = vmatpush.msra.mxu0 0.0
        %409 = vmatpush.msra.mxu0 0.0
        %410 = vmatpush.msra.mxu0 0.0
        %411 = vmatpush.msra.mxu0 0.0
        %412 = vmatpush.msra.mxu0 0.0
        %413 = vmatpush.msra.mxu0 0.0
        %414 = vmatpush.msra.mxu0 0.0
        %415 = vmatpush.msra.mxu0 0.0
        %416 = vmatpush.msra.mxu0 0.0
        %417 = vmatpush.msra.mxu0 0.0
        %418 = vmatpush.msra.mxu0 %v341
        %419 = vmatmul.f32.gmra.mxu0 %v333
        %v420 = vpop.f32.mrf.mxu0
        %v421 = vadd.f32 0.0, %v420
        %422 = vdwg.mxu0
        %s423 = sld [smem:[#allocation2]]
        %v424 = vstv %s423
        %v425 = vmul.f32 %v424, %v361
        %v426 = vmul.f32 %v424, %v381
        %v427 = vmul.f32 %v424, %v401
        %v428 = vmul.f32 %v424, %v421
        %429 = vst [vmem:[#allocation1] ss:$2 sm:$0xff] %v163
        %s430 = scalar_lea.vmem [#allocation1], 16
        %431 = vst [vmem:[%s430] ss:$2 sm:$0xff] %v164
        %v432 = vld.sshfl [vmem:[#allocation1] sm:$0xff pattern:$0x75316420]
        %v433 = vld.sshfl [vmem:[#allocation1 + $0x8] sm:$0xff pattern:$0x75316420]
        %v434 = vld.sshfl [vmem:[#allocation1 + $0x10] sm:$0xff pattern:$0x75316420]
        %v435 = vld.sshfl [vmem:[#allocation1 + $0x18] sm:$0xff pattern:$0x75316420]
        %v440 = vadd.f32 %v425, %v432
        %v441 = vadd.f32 %v426, %v433
        %v442 = vadd.f32 %v427, %v434
        %v443 = vadd.f32 %v428, %v435
        %v448 = vrot.slane %v441, 4
        %v449 = vrot.slane %v443, 4
        %v450 = vsel %vm273, %v440, %v448
        %v451 = vsel %vm273, %v442, %v449
        %454 = vst [vmem:[%s162] sm:$0xff] %v450
        %455 = vst [vmem:[%s162 + $0x8] sm:$0xff] %v451
        %s456 = sand.u32 %s75, 1
        %s457 = scalar_lea.sflag [#allocation5], %s456
        %s458 = sand.u32 %s75, 1
        %s459 = smul.addr %s458, 16
        %s460 = scalar_lea.vmem [#allocation6], %s459
        // Predicated region
        $region33: #{tpu_custom_call.1} parent=27 // pred_check
          %p461 = pneg %p85
        $region34: #{tpu_custom_call.1} parent=27 // pred_check_branch
          %463 = sbr.rel (%p461) target = $region36
        $region35: #{tpu_custom_call.1} parent=27 // pred_region
          %465 = vsyncadd %s457, 0
          %s466 = smul.addr %s20, 4
          %s467 = smul.addr %s466, 4
          %s468 = scalar_lea.hbm %s2, %s467
          %s470 = sshll.u32 %s460, 4
          %s471 = int_to_ptr.vmem [resolvable:$true] %s470
          %s472 = sshll.u32 %s468, 4
          %s473 = int_to_ptr.hbm [resolvable:$true] %s472
          %475 = dma.vmem_to_hbm [thread:$0]  %s471, 256, %s473, %s457
        $region36: #{tpu_custom_call.1} parent=27 // pred_fallthru
          _
      $region28: #{tpu_custom_call.1} parent=5 // pred_fallthru
        _
      %p476 = scmp.le.s32.totalorder 2, %s15
      // Predicated region
      $region37: #{tpu_custom_call.1} parent=5 // pred_check
        %p477 = pneg %p476
      $region38: #{tpu_custom_call.1} parent=5 // pred_check_branch
        %479 = sbr.rel (%p477) target = $region40
      $region39: #{tpu_custom_call.1} parent=5 // pred_region
        %s480 = ssub.s32 %s15, 2
        // Predicated region
        $region41: #{tpu_custom_call.1} parent=39 // pred_check
          %p481 = pneg %p91
        $region42: #{tpu_custom_call.1} parent=39 // pred_check_branch
          %483 = sbr.rel (%p481) target = $region44
        $region43: #{tpu_custom_call.1} parent=39 // pred_region
          %s484 = sand.u32 %s76, 1
          %s485 = scalar_lea.sflag [#allocation5], %s484
          %s486 = sand.u32 %s76, 1
          %s487 = smul.addr %s486, 16
          %s488 = scalar_lea.vmem [#allocation6], %s487
          %490 = dma.done %s485, 256
        $region44: #{tpu_custom_call.1} parent=39 // pred_fallthru
          _
      $region40: #{tpu_custom_call.1} parent=5 // pred_fallthru
        _
    $region6: #{tpu_custom_call.1} parent=1 // loop_footer
      %s19 = sadd.s32 1, %s15
    $region7: #{tpu_custom_call.1} parent=1 // loop_footer_branch
      %14 = sbr.rel target = $region3
    $region8: #{tpu_custom_call.1} parent=1 // loop_exit
      _
    %491 = vsyncpa [#allocation4], 1
    %s492 = scalar_lea.sflag [#allocation4], 1
    %493 = vsyncpa %s492, 1
    %494 = vsyncpa [#allocation5], 1
    %s495 = scalar_lea.sflag [#allocation5], 1
    %496 = vsyncpa %s495, 1

</llo_original>
